<compile_context>
chip_gen: v5e
topology: v5e:2x2
jax: 0.10.0
libtpu: 0.0.40
codegen_flags: <defaults>
</compile_context>

<pallas_src>
import functools

import jax
import jax.numpy as jnp
from jax.experimental import pallas as pl
from jax.experimental.pallas import tpu as pltpu


def _ce_kernel(logits_ref, tgt_ref, out_ref, acc_ref, *, hw_total, tiles_per_split):
    """One grid step processes a (C, TM) tile: C classes x TM pixels of one batch.

    logits_ref: (1, C, TM) float   -- class scores (classes on sublanes, pixels on lanes)
    tgt_ref:    (1, 1, TM) int32   -- target class index per pixel
    out_ref:    (1, 1, 1)  float32 -- per-(batch, split) partial loss sum
    acc_ref:    (1, TM)    float32 -- running per-lane loss accumulator (VMEM scratch)
    """
    j = pl.program_id(2)

    @pl.when(j == 0)
    def _():
        acc_ref[...] = jnp.zeros_like(acc_ref)

    # f32 math for correctness on all generations (v5e has no bf16 VPU/EUP).
    x = logits_ref[0].astype(jnp.float32)                              # (C, TM)
    t = tgt_ref[0]                                                     # (1, TM)

    # Numerically-stable shifted values, reused for BOTH the lse and the gather.
    m = jnp.max(x, axis=0, keepdims=True)                              # (1, TM)
    d = x - m                                                          # (C, TM)
    lse_shift = jnp.log(jnp.sum(jnp.exp(d), axis=0, keepdims=True))    # (1, TM)

    # Gather the (shifted) logit at the target class via a one-hot sublane compare.
    cls = jax.lax.broadcasted_iota(jnp.int32, x.shape, 0)              # (C, TM)
    onehot = cls == t
    g = jnp.sum(jnp.where(onehot, d, 0.0), axis=0, keepdims=True)      # x[t] - m

    # Mask lanes past the real H*W pixels (ragged last tile / clamped dup tile).
    tm = x.shape[1]
    p_global = pl.program_id(1) * tiles_per_split + j                  # unclamped tile idx
    col = p_global * tm + jax.lax.broadcasted_iota(jnp.int32, (1, tm), 1)
    valid = col < hw_total

    # Per-pixel NLL of log_softmax: (lse - m) - (x[t] - m) = lse - x[t].
    acc_ref[...] += jnp.where(valid, lse_shift - g, 0.0)

    @pl.when(j == pl.num_programs(2) - 1)
    def _():
        out_ref[0] = jnp.sum(acc_ref[...], keepdims=True)              # single XLU reduce


def cross_entropy_loss_2d(outputs, targets, *, max_tile_pixels=65536,
                          logits_vmem_budget_bytes=32 << 20):
    """outputs: (N, C, H, W) float, targets: (N, H, W) integer class indices.

    Returns scalar float32 mean cross-entropy (torch NLLLoss reduction='mean',
    weight=None, applied to log_softmax(outputs, dim=1)).
    """
    n, c, h, w = outputs.shape
    hw = h * w

    # Free reshapes only -- no transpose, no pad, no extra HBM traffic.
    logits = outputs.reshape(n, c, hw)                     # (N, C, HW) native dtype
    tgt = targets.astype(jnp.int32).reshape(n, 1, hw)      # (N, 1, HW)

    # ---- Adaptive, C- and dtype-aware tile sizing -------------------------------
    itemsize = outputs.dtype.itemsize
    sublane = 8 * max(1, 4 // itemsize)                    # 8 (f32) / 16 (bf16) / 32 (i8)
    c_pad = pl.cdiv(c, sublane) * sublane                  # padded sublane extent in VMEM

    tile = logits_vmem_budget_bytes // (2 * c_pad * itemsize)   # double-buffered logits
    tile = (tile // 128) * 128
    tile = max(128, min(tile, (max_tile_pixels // 128) * 128))
    tile = min(tile, pl.cdiv(hw, 128) * 128)               # don't over-pad tiny inputs

    num_tiles = pl.cdiv(hw, tile)
    # 2-way pixel split keeps both v7x TensorCores busy even at N=1 (no effect on
    # single-TC v5e/v6e beyond one extra tiny partial).
    n_splits = 2 if num_tiles >= 2 else 1
    tiles_per_split = pl.cdiv(num_tiles, n_splits)

    # Clamp logical tile indices past the real tile count to the last real tile;
    # the kernel's `valid` mask (computed from the UNclamped index) zeroes them.
    def in_map(i, s, j):
        return (i, 0, jnp.minimum(s * tiles_per_split + j, num_tiles - 1))

    def out_map(i, s, j):
        return (i * n_splits + s, 0, 0)

    # VMEM accounting: 2 logits buffers + 2 target buffers + accumulator (+slack).
    bytes_logits = 2 * c_pad * tile * itemsize
    bytes_tgt = 2 * 8 * tile * 4
    bytes_acc = 8 * tile * 4
    vmem_limit = int(min(max((bytes_logits + bytes_tgt + bytes_acc) * 5 // 4 + (2 << 20),
                             32 << 20),
                         56 << 20))                        # stays under v7x's 64 MiB

    kernel = functools.partial(_ce_kernel, hw_total=hw, tiles_per_split=tiles_per_split)

    partials = pl.pallas_call(
        kernel,
        out_shape=jax.ShapeDtypeStruct((n * n_splits, 1, 1), jnp.float32),
        grid_spec=pltpu.PrefetchScalarGridSpec(
            num_scalar_prefetch=0,
            grid=(n, n_splits, tiles_per_split),
            in_specs=[
                pl.BlockSpec((1, c, tile), in_map),
                pl.BlockSpec((1, 1, tile), in_map),
            ],
            out_specs=pl.BlockSpec((1, 1, 1), out_map),
            scratch_shapes=[pltpu.VMEM((1, tile), jnp.float32)],
        ),
        compiler_params=pltpu.CompilerParams(
            # batch + pixel-half axes parallel (megacore / v7x 2 TCs); innermost
            # pixel axis is the serial reduction with the resident accumulator.
            dimension_semantics=("parallel", "parallel", "arbitrary"),
            vmem_limit_bytes=vmem_limit,
        ),
    )(logits, tgt)

    return jnp.sum(partials) / jnp.float32(n * hw)


def _reference(outputs, targets):
    # Pure-JAX reference: mean NLL of log_softmax over dim=1.
    logp = jax.nn.log_softmax(outputs.astype(jnp.float32), axis=1)   # (N,C,H,W)
    t = targets.astype(jnp.int32)                                    # (N,H,W)
    picked = jnp.take_along_axis(logp, t[:, None, :, :], axis=1)[:, 0]
    return -jnp.mean(picked)


if __name__ == "__main__":
    key = jax.random.PRNGKey(0)

    # Test 1: canonical small case.
    k1, k2 = jax.random.split(key)
    N, C, H, W = 2, 4, 16, 16
    outputs = jax.random.normal(k1, (N, C, H, W), dtype=jnp.float32)
    targets = jax.random.randint(k2, (N, H, W), 0, C, dtype=jnp.int32)
    loss = jax.block_until_ready(cross_entropy_loss_2d(outputs, targets))
    ref = jax.block_until_ready(_reference(outputs, targets))
    assert jnp.allclose(loss, ref, rtol=1e-5, atol=1e-5), (loss, ref)

    # Test 2: ragged HW (not a tile multiple), N=1, C not multiple of 8, forced
    # small tile so the 2-way pixel split + clamped duplicate tile are exercised.
    k3, k4 = jax.random.split(k1)
    N, C, H, W = 1, 5, 24, 24
    outputs = jax.random.normal(k3, (N, C, H, W), dtype=jnp.float32)
    targets = jax.random.randint(k4, (N, H, W), 0, C, dtype=jnp.int32)
    loss = jax.block_until_ready(
        cross_entropy_loss_2d(outputs, targets, max_tile_pixels=256))
    ref = jax.block_until_ready(_reference(outputs, targets))
    assert jnp.allclose(loss, ref, rtol=1e-5, atol=1e-5), (loss, ref)

    # Test 3: bf16 logits streamed in native dtype (upcast inside the kernel).
    k5, k6 = jax.random.split(k3)
    N, C, H, W = 2, 19, 20, 20
    outputs = jax.random.normal(k5, (N, C, H, W), dtype=jnp.bfloat16)
    targets = jax.random.randint(k6, (N, H, W), 0, C, dtype=jnp.int32)
    loss = jax.block_until_ready(cross_entropy_loss_2d(outputs, targets))
    ref = jax.block_until_ready(_reference(outputs, targets))
    assert jnp.allclose(loss, ref, rtol=1e-4, atol=1e-4), (loss, ref)

    print("KERNEL_OK")
</pallas_src>

<mosaic_0001>
module attributes {stable_mosaic.version = 11 : i64} {
  func.func @_ce_kernel(%arg0: i32, %arg1: i32, %arg2: i32, %arg3: memref<1x4x256xf32, #tpu.memory_space<vmem>>, %arg4: memref<1x1x256xi32, #tpu.memory_space<vmem>>, %arg5: memref<1x1x1xf32, #tpu.memory_space<vmem>>, %arg6: memref<1x256xf32, #tpu.memory_space<vmem>>) attributes {dimension_semantics = [#tpu.dimension_semantics<parallel>, #tpu.dimension_semantics<parallel>, #tpu.dimension_semantics<arbitrary>], iteration_bounds = array<i64: 2, 1, 1>, scalar_prefetch = 0 : i64, scratch_operands = 1 : i64, tpu.core_type = #tpu.core_type<tc>, window_params = [{transform_indices = @transform_0, window_bounds = array<i64: 1, 4, 256>}, {transform_indices = @transform_1, window_bounds = array<i64: 1, 1, 256>}, {transform_indices = @transform_2, window_bounds = array<i64: 1, 1, 1>}]} {
    %c0_i32 = arith.constant 0 : i32
    %0 = arith.cmpi eq, %arg2, %c0_i32 : i32
    %1 = arith.extui %0 : i1 to i32
    %c0_i32_0 = arith.constant 0 : i32
    %2 = arith.cmpi ne, %1, %c0_i32_0 : i32
    scf.if %2 {
      %cst_17 = arith.constant 0.000000e+00 : f32
      %39 = vector.broadcast %cst_17 : f32 to vector<1x256xf32>
      %c0_18 = arith.constant 0 : index
      %c0_19 = arith.constant 0 : index
      %40 = vector.load %arg6[%c0_18, %c0_19] : memref<1x256xf32, #tpu.memory_space<vmem>>, vector<1x256xf32>
      tpu.vector_store %arg6[%c0_18, %c0_19], %39 {strides = array<i32>} : memref<1x256xf32, #tpu.memory_space<vmem>>, vector<1x256xf32>,
    } else {
    }
    %c0 = arith.constant 0 : index
    %c0_1 = arith.constant 0 : index
    %c0_2 = arith.constant 0 : index
    %3 = vector.load %arg3[%c0, %c0_1, %c0_2] : memref<1x4x256xf32, #tpu.memory_space<vmem>>, vector<1x4x256xf32>
    %4 = vector.shape_cast %3 : vector<1x4x256xf32> to vector<4x256xf32>
    %c0_3 = arith.constant 0 : index
    %c0_4 = arith.constant 0 : index
    %c0_5 = arith.constant 0 : index
    %5 = vector.load %arg4[%c0_3, %c0_4, %c0_5] : memref<1x1x256xi32, #tpu.memory_space<vmem>>, vector<1x1x256xi32>
    %6 = vector.shape_cast %5 : vector<1x1x256xi32> to vector<1x256xi32>
    %cst = arith.constant dense<0xFF800000> : vector<256xf32>
    %7 = vector.multi_reduction <maximumf>, %4, %cst [0] : vector<4x256xf32> to vector<256xf32>
    %8 = vector.shape_cast %7 : vector<256xf32> to vector<1x256xf32>
    %9 = vector.broadcast %8 : vector<1x256xf32> to vector<4x256xf32>
    %10 = arith.subf %4, %9 : vector<4x256xf32>
    %11 = math.exp %10 : vector<4x256xf32>
    %cst_6 = arith.constant dense<0.000000e+00> : vector<256xf32>
    %12 = vector.multi_reduction <add>, %11, %cst_6 [0] : vector<4x256xf32> to vector<256xf32>
    %13 = vector.shape_cast %12 : vector<256xf32> to vector<1x256xf32>
    %14 = math.log %13 : vector<1x256xf32>
    %15 = tpu.iota {dimensions = array<i32: 0>} : vector<4x256xi32>
    %16 = vector.broadcast %6 : vector<1x256xi32> to vector<4x256xi32>
    %17 = arith.cmpi eq, %15, %16 : vector<4x256xi32>
    %cst_7 = arith.constant 0.000000e+00 : f32
    %18 = vector.broadcast %cst_7 : f32 to vector<4x256xf32>
    %19 = arith.select %17, %10, %18 : vector<4x256xi1>, vector<4x256xf32>
    %cst_8 = arith.constant dense<0.000000e+00> : vector<256xf32>
    %20 = vector.multi_reduction <add>, %19, %cst_8 [0] : vector<4x256xf32> to vector<256xf32>
    %21 = vector.shape_cast %20 : vector<256xf32> to vector<1x256xf32>
    %c1_i32 = arith.constant 1 : i32
    %22 = arith.muli %arg1, %c1_i32 : i32
    %23 = arith.addi %22, %arg2 : i32
    %c256_i32 = arith.constant 256 : i32
    %24 = arith.muli %23, %c256_i32 : i32
    %25 = tpu.iota {dimensions = array<i32: 1>} : vector<1x256xi32>
    %26 = vector.broadcast %24 : i32 to vector<1x256xi32>
    %27 = arith.addi %26, %25 : vector<1x256xi32>
    %c256_i32_9 = arith.constant 256 : i32
    %28 = vector.broadcast %c256_i32_9 : i32 to vector<1x256xi32>
    %29 = arith.cmpi slt, %27, %28 : vector<1x256xi32>
    %c0_10 = arith.constant 0 : index
    %c0_11 = arith.constant 0 : index
    %30 = vector.load %arg6[%c0_10, %c0_11] : memref<1x256xf32, #tpu.memory_space<vmem>>, vector<1x256xf32>
    %31 = arith.subf %14, %21 : vector<1x256xf32>
    %cst_12 = arith.constant 0.000000e+00 : f32
    %32 = vector.broadcast %cst_12 : f32 to vector<1x256xf32>
    %33 = arith.select %29, %31, %32 : vector<1x256xi1>, vector<1x256xf32>
    %34 = arith.addf %30, %33 : vector<1x256xf32>
    %c0_13 = arith.constant 0 : index
    %c0_14 = arith.constant 0 : index
    %35 = vector.load %arg6[%c0_13, %c0_14] : memref<1x256xf32, #tpu.memory_space<vmem>>, vector<1x256xf32>
    tpu.vector_store %arg6[%c0_13, %c0_14], %34 {strides = array<i32>} : memref<1x256xf32, #tpu.memory_space<vmem>>, vector<1x256xf32>,
    %c0_i32_15 = arith.constant 0 : i32
    %36 = arith.cmpi eq, %arg2, %c0_i32_15 : i32
    %37 = arith.extui %36 : i1 to i32
    %c0_i32_16 = arith.constant 0 : i32
    %38 = arith.cmpi ne, %37, %c0_i32_16 : i32
    scf.if %38 {
      %c0_17 = arith.constant 0 : index
      %c0_18 = arith.constant 0 : index
      %39 = vector.load %arg6[%c0_17, %c0_18] : memref<1x256xf32, #tpu.memory_space<vmem>>, vector<1x256xf32>
      %40 = vector.shape_cast %39 : vector<1x256xf32> to vector<1x1x256xf32>
      %cst_19 = arith.constant dense<0.000000e+00> : vector<1xf32>
      %41 = vector.multi_reduction <add>, %40, %cst_19 [1, 2] : vector<1x1x256xf32> to vector<1xf32>
      %42 = vector.shape_cast %41 : vector<1xf32> to vector<1x1x1xf32>
      %43 = vector.extract %42[0, 0, 0] : f32 from vector<1x1x1xf32>
      %44 = vector.broadcast %43 : f32 to vector<1x1xf32>
      %c0_20 = arith.constant 0 : index
      %c0_21 = arith.constant 0 : index
      %c0_22 = arith.constant 0 : index
      %45 = vector.load %arg5[%c0_20, %c0_21, %c0_22] : memref<1x1x1xf32, #tpu.memory_space<vmem>>, vector<1x1x1xf32>
      %46 = vector.shape_cast %45 : vector<1x1x1xf32> to vector<1x1xf32>
      %47 = vector.shape_cast %44 : vector<1x1xf32> to vector<1x1x1xf32>
      tpu.vector_store %arg5[%c0_20, %c0_21, %c0_22], %47 {strides = array<i32>} : memref<1x1x1xf32, #tpu.memory_space<vmem>>, vector<1x1x1xf32>,
    } else {
    }
    return
  }
  func.func @transform_0(%arg0: i32, %arg1: i32, %arg2: i32) -> (i32, i32, i32) {
    %c1_i32 = arith.constant 1 : i32
    %0 = arith.muli %arg1, %c1_i32 : i32
    %1 = arith.addi %0, %arg2 : i32
    %c0_i32 = arith.constant 0 : i32
    %2 = arith.minsi %1, %c0_i32 : i32
    %c0_i32_0 = arith.constant 0 : i32
    %c0_i32_1 = arith.constant 0 : i32
    return %arg0, %c0_i32_0, %2 : i32, i32, i32
  }
  func.func @transform_1(%arg0: i32, %arg1: i32, %arg2: i32) -> (i32, i32, i32) {
    %c1_i32 = arith.constant 1 : i32
    %0 = arith.muli %arg1, %c1_i32 : i32
    %1 = arith.addi %0, %arg2 : i32
    %c0_i32 = arith.constant 0 : i32
    %2 = arith.minsi %1, %c0_i32 : i32
    %c0_i32_0 = arith.constant 0 : i32
    %c0_i32_1 = arith.constant 0 : i32
    return %arg0, %c0_i32_0, %2 : i32, i32, i32
  }
  func.func @transform_2(%arg0: i32, %arg1: i32, %arg2: i32) -> (i32, i32, i32) {
    %c1_i32 = arith.constant 1 : i32
    %0 = arith.muli %arg0, %c1_i32 : i32
    %1 = arith.addi %0, %arg1 : i32
    %c0_i32 = arith.constant 0 : i32
    %c0_i32_0 = arith.constant 0 : i32
    %c0_i32_1 = arith.constant 0 : i32
    return %1, %c0_i32, %c0_i32_0 : i32, i32, i32
  }
}

</mosaic_0001>

<llo_original>
// kernel: tpu_custom_call.1
$region0: #{tpu_custom_call.1}
  #allocation0 [shape = 'u32[]', space=smem, size = 0x4, offset = 0x4, fixed_abs, tag = 'smem constant byte address 0x4 - core index']
  #allocation1 [shape = 'u32[72,128]{1,0:T(1,128)}', space=vmem, size = 0x9000, scoped, tag = 'internal scratch']
  #allocation2 [shape = 'f32[1,256]{1,0:T(1,128)}', space=vmem, size = 0x400, scoped, tag = 'scratch operand']
  %s0 = inlined_call_operand.hbm [shape: f32[2,4,256], index: 0, kind: input, shape index: {}]
  %s1 = inlined_call_operand.hbm [shape: s32[2,1,256], index: 1, kind: input, shape index: {}]
  %s2 = inlined_call_operand.vmem [shape: f32[2,1,1], index: 2, kind: output, shape index: {}]
  %s3 = sld [smem:[#allocation0]]
  $region57: #{tpu_custom_call.1} parent=0
    _
  %s5 = ssub.s32 1, %s3
  %s6 = scalar_select 0, %s5, %s3
  $region1: #{tpu_custom_call.1} parent=0
    #allocation3 [shape = 'u8[8192]{0}', space=vmem, size = 0x2000, scoped, tag = 'input window, operand 0']
    #allocation4 [shape = 's32[2]{0}', space=sflag, size = 0x8, scoped, tag = 'scoped memory for tpu_custom_call.1']
    #allocation5 [shape = 'u8[2048]{0}', space=vmem, size = 0x800, scoped, tag = 'input window, operand 1']
    #allocation6 [shape = 's32[2]{0}', space=sflag, size = 0x8, scoped, tag = 'scoped memory for tpu_custom_call.1']
    %7 = vsyncpa [#allocation4], 0
    %s8 = scalar_lea.sflag [#allocation4], 1
    %9 = vsyncpa %s8, 0
    %10 = vsyncpa [#allocation6], 0
    %s11 = scalar_lea.sflag [#allocation6], 1
    %12 = vsyncpa %s11, 0
    loop: start=0, step=1, limit=4
    $region2: #{tpu_custom_call.1} parent=1 // loop_pre_header
      _
    $region3: #{tpu_custom_call.1} parent=1 // loop_header
      %s14 = sphi 0, %s18
      %p15 = scmp.ge.s32.totalorder %s14, 4
      %s21 = sphi 0, %s40
      %s22 = sphi 0, %s36
      %s23 = sphi 0, %s32
      %s24 = sphi 0, %s21
      %s25 = sphi 0, %s22
      %s26 = sphi 0, %s23
      %s27 = sphi 0, %s24
      %s28 = sphi 0, %s25
      %s29 = sphi 0, %s26
      %s51 = sphi 0, %s53
      %s54 = sphi 0, %s51
      %s55 = sphi 0, %s54
      %s71 = sphi 0, %s55
      %s85 = sphi 0, %s87
      %s88 = sphi 0, %s85
      %s89 = sphi 0, %s88
      %s105 = sphi 0, %s89
      %s113 = sphi 0, %s115
      %s116 = sphi 0, %s113
      %s117 = sphi 0, %s116
      %s133 = sphi 0, %s117
    $region4: #{tpu_custom_call.1} parent=1 // loop_header_branch
      %17 = sbr.rel (%p15) target = $region8
    $region5: #{tpu_custom_call.1} parent=1 // loop_body
      %s19 = ssub.s32 %s14, 1
      %s20 = ssub.s32 %s14, 2
      %s30 = sadd.s32 1, %s23
      %p31 = scmp.ge.s32.totalorder %s30, 1
      %s32 = scalar_select %p31, 0, %s30
      %s33 = sadd.s32 1, %s22
      %s34 = scalar_select %p31, %s33, %s22
      %p35 = scmp.ge.s32.totalorder %s34, 1
      %s36 = scalar_select %p35, 0, %s34
      %s37 = sadd.s32 1, %s21
      %s38 = scalar_select %p35, %s37, %s21
      %p39 = scmp.ge.s32.totalorder %s38, 2
      %s40 = scalar_select %p39, 0, %s38
      %s41 = sadd.s32 %s22, %s23
      %p42 = scmp.lt.s32.totalorder %s41, 0
      %s43 = scalar_select %p42, %s41, 0
      %s44 = sadd.s32 %s36, %s32
      %p45 = scmp.lt.s32.totalorder %s44, 0
      %s46 = scalar_select %p45, %s44, 0
      %s47 = ssub.s32 %s21, %s40
      %s48 = ssub.s32 %s43, %s46
      %s49 = sor.u32 %s47, %s48
      %p50 = scmp.eq.s32.totalorder %s49, 0
      %s52 = sadd.s32 %s51, 1
      %s53 = scalar_select %p50, %s51, %s52
      %p56 = pneg %p50
      %p57 = scmp.eq.s32.totalorder %s14, 1
      %p58 = por %p56, %p57
      %p59 = scmp.ne.s32.totalorder %s51, %s54
      %p60 = scmp.eq.s32.totalorder %s14, 0
      %p61 = por %p59, %p60
      %p62 = scmp.ne.s32.totalorder %s51, %s54
      %p63 = scmp.eq.s32.totalorder %s19, 1
      %p64 = por %p62, %p63
      %p65 = scmp.ne.s32.totalorder %s54, %s55
      %p66 = scmp.eq.s32.totalorder %s19, 0
      %p67 = por %p65, %p66
      %p68 = scmp.ne.s32.totalorder %s54, %s55
      %p69 = scmp.eq.s32.totalorder %s20, 1
      %p70 = por %p68, %p69
      %p72 = scmp.ne.s32.totalorder %s55, %s71
      %p73 = scmp.eq.s32.totalorder %s20, 0
      %p74 = por %p72, %p73
      %s75 = sadd.s32 %s22, %s23
      %p76 = scmp.lt.s32.totalorder %s75, 0
      %s77 = scalar_select %p76, %s75, 0
      %s78 = sadd.s32 %s36, %s32
      %p79 = scmp.lt.s32.totalorder %s78, 0
      %s80 = scalar_select %p79, %s78, 0
      %s81 = ssub.s32 %s21, %s40
      %s82 = ssub.s32 %s77, %s80
      %s83 = sor.u32 %s81, %s82
      %p84 = scmp.eq.s32.totalorder %s83, 0
      %s86 = sadd.s32 %s85, 1
      %s87 = scalar_select %p84, %s85, %s86
      %p90 = pneg %p84
      %p91 = scmp.eq.s32.totalorder %s14, 1
      %p92 = por %p90, %p91
      %p93 = scmp.ne.s32.totalorder %s85, %s88
      %p94 = scmp.eq.s32.totalorder %s14, 0
      %p95 = por %p93, %p94
      %p96 = scmp.ne.s32.totalorder %s85, %s88
      %p97 = scmp.eq.s32.totalorder %s19, 1
      %p98 = por %p96, %p97
      %p99 = scmp.ne.s32.totalorder %s88, %s89
      %p100 = scmp.eq.s32.totalorder %s19, 0
      %p101 = por %p99, %p100
      %p102 = scmp.ne.s32.totalorder %s88, %s89
      %p103 = scmp.eq.s32.totalorder %s20, 1
      %p104 = por %p102, %p103
      %p106 = scmp.ne.s32.totalorder %s89, %s105
      %p107 = scmp.eq.s32.totalorder %s20, 0
      %p108 = por %p106, %p107
      %s109 = sadd.s32 %s21, %s22
      %s110 = sadd.s32 %s40, %s36
      %s111 = ssub.s32 %s109, %s110
      %p112 = scmp.eq.s32.totalorder %s111, 0
      %s114 = sadd.s32 %s113, 1
      %s115 = scalar_select %p112, %s113, %s114
      %p118 = pneg %p112
      %p119 = scmp.eq.s32.totalorder %s14, 1
      %p120 = por %p118, %p119
      %p121 = scmp.ne.s32.totalorder %s113, %s116
      %p122 = scmp.eq.s32.totalorder %s14, 0
      %p123 = por %p121, %p122
      %p124 = scmp.ne.s32.totalorder %s113, %s116
      %p125 = scmp.eq.s32.totalorder %s19, 1
      %p126 = por %p124, %p125
      %p127 = scmp.ne.s32.totalorder %s116, %s117
      %p128 = scmp.eq.s32.totalorder %s19, 0
      %p129 = por %p127, %p128
      %p130 = scmp.ne.s32.totalorder %s116, %s117
      %p131 = scmp.eq.s32.totalorder %s20, 1
      %p132 = por %p130, %p131
      %p134 = scmp.ne.s32.totalorder %s117, %s133
      %p135 = scmp.eq.s32.totalorder %s20, 0
      %p136 = por %p134, %p135
      %p137 = scmp.le.s32.totalorder 1, %s14
      %p138 = scmp.lt.s32.totalorder %s14, 3
      %p139 = pnand %p137, %p138
      %p140 = pneg %p139
      // Predicated region
      $region9: #{tpu_custom_call.1} parent=5 // pred_check
        _
      $region10: #{tpu_custom_call.1} parent=5 // pred_check_branch
        %142 = sbr.rel (%p139) target = $region12
      $region11: #{tpu_custom_call.1} parent=5 // pred_region
        %s143 = ssub.s32 %s14, 1
      $region12: #{tpu_custom_call.1} parent=5 // pred_fallthru
        _
      %p144 = scmp.lt.s32.totalorder %s14, 2
      // Predicated region
      $region13: #{tpu_custom_call.1} parent=5 // pred_check
        %p145 = pneg %p144
      $region14: #{tpu_custom_call.1} parent=5 // pred_check_branch
        %147 = sbr.rel (%p145) target = $region16
      $region15: #{tpu_custom_call.1} parent=5 // pred_region
        // Predicated region
        $region17: #{tpu_custom_call.1} parent=15 // pred_check
          %p148 = pneg %p61
        $region18: #{tpu_custom_call.1} parent=15 // pred_check_branch
          %150 = sbr.rel (%p148) target = $region20
        $region19: #{tpu_custom_call.1} parent=15 // pred_region
          %s151 = sand.u32 %s51, 1
          %s152 = scalar_lea.sflag [#allocation4], %s151
          %s153 = sand.u32 %s51, 1
          %s154 = smul.addr %s153, 8
          %s155 = scalar_lea.vmem [#allocation3], %s154
          %s156 = sadd.s32 %s22, %s23
          %p157 = scmp.lt.s32.totalorder %s156, 0
          %s158 = scalar_select %p157, %s156, 0
          %s159 = smul.u32 2, %s158
          %161 = vsyncadd %s152, 0
          %s162 = smul.addr %s21, 2
          %s163 = sadd.s32 %s159, %s162
          %s164 = smul.addr %s163, 4
          %s165 = scalar_lea.hbm %s0, %s164
          %s167 = sshll.u32 %s165, 4
          %s168 = int_to_ptr.hbm [resolvable:$true] %s167
          %s169 = sshll.u32 %s155, 4
          %s170 = int_to_ptr.vmem [resolvable:$true] %s169
          %172 = dma.hbm_to_vmem [thread:$0]  %s168, 128, %s170, %s152
        $region20: #{tpu_custom_call.1} parent=15 // pred_fallthru
          _
        // Predicated region
        $region21: #{tpu_custom_call.1} parent=15 // pred_check
          %p173 = pneg %p95
        $region22: #{tpu_custom_call.1} parent=15 // pred_check_branch
          %175 = sbr.rel (%p173) target = $region24
        $region23: #{tpu_custom_call.1} parent=15 // pred_region
          %s176 = sand.u32 %s85, 1
          %s177 = scalar_lea.sflag [#allocation6], %s176
          %s178 = sand.u32 %s85, 1
          %s179 = smul.addr %s178, 2
          %s180 = scalar_lea.vmem [#allocation5], %s179
          %s181 = sadd.s32 %s22, %s23
          %p182 = scmp.lt.s32.totalorder %s181, 0
          %s183 = scalar_select %p182, %s181, 0
          %s184 = smul.u32 2, %s183
          %186 = vsyncadd %s177, 0
          %s187 = smul.addr %s21, 2
          %s188 = sadd.s32 %s184, %s187
          %s189 = scalar_lea.hbm %s1, %s188
          %s191 = sshll.u32 %s189, 4
          %s192 = int_to_ptr.hbm [resolvable:$true] %s191
          %s193 = sshll.u32 %s180, 4
          %s194 = int_to_ptr.vmem [resolvable:$true] %s193
          %196 = dma.hbm_to_vmem [thread:$0]  %s192, 32, %s194, %s177
        $region24: #{tpu_custom_call.1} parent=15 // pred_fallthru
          _
      $region16: #{tpu_custom_call.1} parent=5 // pred_fallthru
        _
      %p197 = scmp.le.s32.totalorder 1, %s14
      %p198 = scmp.lt.s32.totalorder %s14, 3
      %p199 = pnand %p197, %p198
      %p200 = pneg %p199
      // Predicated region
      $region25: #{tpu_custom_call.1} parent=5 // pred_check
        _
      $region26: #{tpu_custom_call.1} parent=5 // pred_check_branch
        %202 = sbr.rel (%p199) target = $region28
      $region27: #{tpu_custom_call.1} parent=5 // pred_region
        %s203 = ssub.s32 %s14, 1
        %s204 = sand.u32 %s54, 1
        %s205 = scalar_lea.sflag [#allocation4], %s204
        %s206 = sand.u32 %s54, 1
        %s207 = smul.addr %s206, 8
        %s208 = scalar_lea.vmem [#allocation3], %s207
        // Predicated region
        $region29: #{tpu_custom_call.1} parent=27 // pred_check
          %p209 = pneg %p67
        $region30: #{tpu_custom_call.1} parent=27 // pred_check_branch
          %211 = sbr.rel (%p209) target = $region32
        $region31: #{tpu_custom_call.1} parent=27 // pred_region
          %213 = dma.done %s205, 128
        $region32: #{tpu_custom_call.1} parent=27 // pred_fallthru
          _
        %s214 = sand.u32 %s88, 1
        %s215 = scalar_lea.sflag [#allocation6], %s214
        %s216 = sand.u32 %s88, 1
        %s217 = smul.addr %s216, 2
        %s218 = scalar_lea.vmem [#allocation5], %s217
        // Predicated region
        $region33: #{tpu_custom_call.1} parent=27 // pred_check
          %p219 = pneg %p101
        $region34: #{tpu_custom_call.1} parent=27 // pred_check_branch
          %221 = sbr.rel (%p219) target = $region36
        $region35: #{tpu_custom_call.1} parent=27 // pred_region
          %223 = dma.done %s215, 32
        $region36: #{tpu_custom_call.1} parent=27 // pred_fallthru
          _
        %s224 = sand.u32 %s54, 1
        %s225 = scalar_lea.sflag [#allocation4], %s224
        %s226 = sand.u32 %s54, 1
        %s227 = smul.addr %s226, 8
        %s228 = scalar_lea.vmem [#allocation3], %s227
        %p229 = pneg %p67
        %p230 = pneg %p64
        %s231 = sand.u32 %s88, 1
        %s232 = scalar_lea.sflag [#allocation6], %s231
        %s233 = sand.u32 %s88, 1
        %s234 = smul.addr %s233, 2
        %s235 = scalar_lea.vmem [#allocation5], %s234
        %p236 = pneg %p101
        %p237 = pneg %p98
        %p238 = pneg %p129
        %p239 = pneg %p126
        %s240 = sadd.s32 %s24, %s25
        %p241 = scmp.lt.s32.totalorder %s240, 1
        %s242 = scalar_select %p241, %s240, 1
        %s243 = scalar_lea.vmem %s2, %s242
        %s244 = sadd.s32 %s25, %s26
        %p245 = scmp.lt.s32.totalorder %s244, 0
        %s246 = scalar_select %p245, %s244, 0
        %s247 = smul.u32 2, %s246
        %s248 = sadd.s32 %s25, %s26
        %p249 = scmp.lt.s32.totalorder %s248, 0
        %s250 = scalar_select %p249, %s248, 0
        %s251 = smul.u32 2, %s250
        %s252 = sadd.s32 %s24, %s25
        %p253 = scmp.lt.s32.totalorder %s252, 1
        %s254 = scalar_select %p253, %s252, 1
        %s255 = scalar_lea.vmem %s2, %s254
        %s256 = sadd.s32 %s24, %s25
        %p257 = scmp.eq.s32.totalorder %s26, 0
        // Predicated region
        $region37: #{tpu_custom_call.1} parent=27 // pred_check
          %p258 = pneg %p257
        $region38: #{tpu_custom_call.1} parent=27 // pred_check_branch
          %260 = sbr.rel (%p258) target = $region40
        $region39: #{tpu_custom_call.1} parent=27 // pred_region
          %v261 = vlaneseq
          %vm262 = vcmp.ge.s32.totalorder %v261, 0
          %vm263 = vcmp.lt.s32.totalorder %v261, 256
          %vm264 = vmand %vm262, %vm263
          %265 = vst.msk [vmem:[#allocation2] sm:$0x3] %vm264, 0.0
        $region40: #{tpu_custom_call.1} parent=27 // pred_fallthru
          _
        %v266 = vld [vmem:[%s208] sm:$0xff]
        %v267 = vld [vmem:[%s218] sm:$0x3]
        %269 = vst [vmem:[#allocation1] ss:$2 sm:$0xff] %v266
        %v270 = vld.sshfl [vmem:[#allocation1] sm:$0xff pattern:$0x75316420]
        %v271 = vld.sshfl [vmem:[#allocation1 + $0x8] sm:$0xff pattern:$0x75316420]
        %vm274 = vcmask 1043456
        %v275 = vsel %vm274, %v270, -inf
        %v276 = vrot.slane %v275, 4
        %v277 = vmax.f32 %v275, %v276
        %v278 = vrot.slane %v277, 2
        %v279 = vmax.f32 %v277, %v278
        %v280 = vrot.slane %v279, 1
        %v281 = vmax.f32 %v279, %v280
        %v282 = vsel %vm274, %v271, -inf
        %v283 = vrot.slane %v282, 4
        %v284 = vmax.f32 %v282, %v283
        %v285 = vrot.slane %v284, 2
        %v286 = vmax.f32 %v284, %v285
        %v287 = vrot.slane %v286, 1
        %v288 = vmax.f32 %v286, %v287
        %v291 = vrot.slane %v288, 4
        %v292 = vsel %vm274, %v281, %v291
        %v294 = vsub.f32 %v266, %v292
        %v295 = vmul.f32 %v294, 1.442695
        %v296 = vpow.pop %v295
        %298 = vst [vmem:[#allocation1] ss:$2 sm:$0xff] %v296
        %v299 = vld.sshfl [vmem:[#allocation1] sm:$0xff pattern:$0x75316420]
        %v300 = vld.sshfl [vmem:[#allocation1 + $0x8] sm:$0xff pattern:$0x75316420]
        %v303 = vsel %vm274, %v299, 0.0
        %v304 = vrot.slane %v303, 4
        %v305 = vadd.f32 %v303, %v304
        %v306 = vrot.slane %v305, 2
        %v307 = vadd.f32 %v305, %v306
        %v308 = vrot.slane %v307, 1
        %v309 = vadd.f32 %v307, %v308
        %v310 = vsel %vm274, %v300, 0.0
        %v311 = vrot.slane %v310, 4
        %v312 = vadd.f32 %v310, %v311
        %v313 = vrot.slane %v312, 2
        %v314 = vadd.f32 %v312, %v313
        %v315 = vrot.slane %v314, 1
        %v316 = vadd.f32 %v314, %v315
        %v317 = vlog2.pop %v309
        %v318 = vmul.f32 %v317, 0.6931472
        %v319 = vlog2.pop %v316
        %v320 = vmul.f32 %v319, 0.6931472
        %v321 = vlaneseq
        %v322 = vshrl.u32 %v321, 7
        %v323 = vperm.slane %v267, 0
        %v324 = vperm.slane %v267, 1
        %vm325 = vcmp.eq.s32.totalorder %v322, %v323
        %vm326 = vcmp.eq.s32.totalorder %v322, %v324
        %328 = vst [vmem:[#allocation1] ss:$2 sm:$0xff] %v294
        %v329 = vld.sshfl [vmem:[#allocation1] sm:$0xff pattern:$0x75316420]
        %v330 = vld.sshfl [vmem:[#allocation1 + $0x8] sm:$0xff pattern:$0x75316420]
        %v333 = vsel %vm325, %v329, 0.0
        %v334 = vsel %vm326, %v330, 0.0
        %v335 = vsel %vm274, %v333, 0.0
        %v336 = vrot.slane %v335, 4
        %v337 = vadd.f32 %v335, %v336
        %v338 = vrot.slane %v337, 2
        %v339 = vadd.f32 %v337, %v338
        %v340 = vrot.slane %v339, 1
        %v341 = vadd.f32 %v339, %v340
        %v342 = vsel %vm274, %v334, 0.0
        %v343 = vrot.slane %v342, 4
        %v344 = vadd.f32 %v342, %v343
        %v345 = vrot.slane %v344, 2
        %v346 = vadd.f32 %v344, %v345
        %v347 = vrot.slane %v346, 1
        %v348 = vadd.f32 %v346, %v347
        %s349 = sadd.s32 %s25, %s26
        %s350 = smul.u32 %s349, 256
        %v351 = vlaneseq
        %v352 = vand.u32 %v351, 127
        %v353 = vadd.s32 %v352, 128
        %v354 = vstv %s350
        %v355 = vadd.s32 %v354, %v352
        %v356 = vadd.s32 %v354, %v353
        %vm357 = vcmp.lt.s32.totalorder %v355, 256
        %vm358 = vcmp.lt.s32.totalorder %v356, 256
        %v359 = vld [vmem:[#allocation2] sm:$0x3]
        %v360 = vsub.f32 %v318, %v341
        %v361 = vsub.f32 %v320, %v348
        %v362 = vsel %vm357, %v360, 0.0
        %v363 = vsel %vm358, %v361, 0.0
        %v366 = vrot.slane %v363, 7
        %vm367 = vcmask 1040384
        %v368 = vsel %vm367, %v362, %v366
        %v370 = vadd.f32 %v359, %v368
        %v371 = vlaneseq
        %vm372 = vcmp.ge.s32.totalorder %v371, 0
        %vm373 = vcmp.lt.s32.totalorder %v371, 256
        %vm374 = vmand %vm372, %vm373
        %375 = vst.msk [vmem:[#allocation2] sm:$0x3] %vm374, %v370
        // Predicated region
        $region41: #{tpu_custom_call.1} parent=27 // pred_check
          %p376 = pneg %p257
        $region42: #{tpu_custom_call.1} parent=27 // pred_check_branch
          %378 = sbr.rel (%p376) target = $region44
        $region43: #{tpu_custom_call.1} parent=27 // pred_region
          %v379 = vld [vmem:[#allocation2] sm:$0x3]
          %v381 = vperm.slane %v379, 0
          %v382 = vperm.slane %v379, 1
          %v385 = vsel %vm367, %v381, 0.0
          %v386 = vsel %vm367, %v382, 0.0
          %v387 = vadd.f32 %v385, %v386
          %388 = vadd.xlane.f32.xlu0 %v387
          %v389 = vpop.xlane.xlu0 %388
          %v390 = vrot.slane %v389, 4
          %v391 = vadd.f32 %v389, %v390
          %v392 = vrot.slane %v391, 2
          %v393 = vadd.f32 %v391, %v392
          %v394 = vrot.slane %v393, 1
          %v395 = vadd.f32 %v393, %v394
          %s396 = vtos %v395
          %v397 = vstv %s396
          %vm398 = vcmask 0
          %399 = vst.msk [vmem:[%s255] sm:$0x1] %vm398, %v397
        $region44: #{tpu_custom_call.1} parent=27 // pred_fallthru
          _
        %s400 = sadd.s32 %s24, %s25
        %p401 = scmp.lt.s32.totalorder %s400, 1
        %s402 = scalar_select %p401, %s400, 1
        %s403 = scalar_lea.vmem %s2, %s402
        // Predicated region
        $region45: #{tpu_custom_call.1} parent=27 // pred_check
          %p404 = pneg %p126
        $region46: #{tpu_custom_call.1} parent=27 // pred_check_branch
          %406 = sbr.rel (%p404) target = $region48
        $region47: #{tpu_custom_call.1} parent=27 // pred_region
          %s407 = sadd.s32 %s24, %s25
        $region48: #{tpu_custom_call.1} parent=27 // pred_fallthru
          _
      $region28: #{tpu_custom_call.1} parent=5 // pred_fallthru
        _
      %p408 = scmp.le.s32.totalorder 2, %s14
      // Predicated region
      $region49: #{tpu_custom_call.1} parent=5 // pred_check
        %p409 = pneg %p408
      $region50: #{tpu_custom_call.1} parent=5 // pred_check_branch
        %411 = sbr.rel (%p409) target = $region52
      $region51: #{tpu_custom_call.1} parent=5 // pred_region
        %s412 = ssub.s32 %s14, 2
        // Predicated region
        $region53: #{tpu_custom_call.1} parent=51 // pred_check
          %p413 = pneg %p132
        $region54: #{tpu_custom_call.1} parent=51 // pred_check_branch
          %415 = sbr.rel (%p413) target = $region56
        $region55: #{tpu_custom_call.1} parent=51 // pred_region
          %s416 = sadd.s32 %s27, %s28
          %p417 = scmp.lt.s32.totalorder %s416, 1
          %s418 = scalar_select %p417, %s416, 1
          %s419 = scalar_lea.vmem %s2, %s418
        $region56: #{tpu_custom_call.1} parent=51 // pred_fallthru
          _
      $region52: #{tpu_custom_call.1} parent=5 // pred_fallthru
        _
    $region6: #{tpu_custom_call.1} parent=1 // loop_footer
      %s18 = sadd.s32 1, %s14
    $region7: #{tpu_custom_call.1} parent=1 // loop_footer_branch
      %13 = sbr.rel target = $region3
    $region8: #{tpu_custom_call.1} parent=1 // loop_exit
      _
    %420 = vsyncpa [#allocation4], 1
    %s421 = scalar_lea.sflag [#allocation4], 1
    %422 = vsyncpa %s421, 1
    %423 = vsyncpa [#allocation6], 1
    %s424 = scalar_lea.sflag [#allocation6], 1
    %425 = vsyncpa %s424, 1

</llo_original>
